<compile_context>
chip_gen: v6e
topology: v6e:2x2x1
jax: 0.10.0
libtpu: 0.0.40
codegen_flags: <defaults>
</compile_context>

<pallas_src>
import jax
import jax.numpy as jnp
from jax.experimental import pallas as pl
from jax.experimental.pallas import tpu as pltpu


def _copy_kernel(x_ref, o_ref):
    # Full-block copy; the chomp is expressed entirely via the BlockSpecs.
    o_ref[...] = x_ref[...]


def _round_up(x: int, m: int) -> int:
    return ((x + m - 1) // m) * m


def _cdiv(a: int, b: int) -> int:
    return (a + b - 1) // b


def _tile_budget_bytes() -> int:
    """Generation-aware per-tile byte budget (in + out are each double-buffered)."""
    try:
        vmem_cap = int(pltpu.get_tpu_info().vmem_capacity_bytes)
    except Exception:
        vmem_cap = 64 << 20  # conservative fallback: v7x per-TC VMEM
    if vmem_cap >= (100 << 20):
        # v5e / v6e: 128 MiB physical VMEM -> 16 MiB tiles (4x buffered = 64 MiB).
        return 16 << 20
    # v7x: 64 MiB per TC -> 8 MiB tiles (4x buffered = 32 MiB, headroom left).
    return 8 << 20


def _choose_tiles(rows: int, l_out: int, itemsize: int, tile_budget: int):
    # Sublane packing: 8 rows for 4-byte dtypes, 16 for 2-byte, 32 for 1-byte.
    sub = {4: 8, 2: 16, 1: 32}.get(itemsize, 8)
    lane = 128

    rows_pad = _round_up(rows, sub)
    l_pad = _round_up(l_out, lane)

    # Provisional row tile used only to size the column cap.
    rows_tile = min(rows_pad, 256)
    cap_cols = max(lane, (tile_budget // (rows_tile * itemsize)) // lane * lane)

    if l_pad <= cap_cols:
        # Whole (padded) time axis fits one column block: grow the row tile to
        # fill the per-tile budget (removes the 256-row cap) so the grid shrinks.
        l_tile = l_pad
        rows_tile = max(sub, (tile_budget // (l_tile * itemsize)) // sub * sub)
        rows_tile = min(rows_tile, rows_pad)
    else:
        # Multiple column blocks: make them roughly even (multiples of 128) so
        # the last block is not a degenerate masked sliver.
        n_col_blocks = _cdiv(l_pad, cap_cols)
        l_tile = min(cap_cols, _round_up(_cdiv(l_pad, n_col_blocks), lane))

    # Guarantee >= 2 grid blocks (preferring a row split) when possible so v7x's
    # two TensorCores both get work; neutral on single-TC v5e/v6e.
    if _cdiv(rows, rows_tile) * _cdiv(l_out, l_tile) < 2 and rows_pad >= 2 * sub:
        rows_tile = min(rows_tile, max(sub, _round_up(_cdiv(rows, 2), sub)))

    return rows_tile, l_tile


def chomp1d(x: jax.Array, chomp_size: int) -> jax.Array:
    """Pallas equivalent of Chomp1d.forward: x[:, :, :-chomp_size]."""
    assert chomp_size > 0, "chomp_size must be positive (matches x[:,:,:-k])"
    N, C, L = x.shape
    L_out = L - chomp_size
    assert L_out > 0, "chomp_size must be smaller than sequence length"

    rows = N * C
    x2 = x.reshape(rows, L)  # free row-major reshape: (N, C, L) -> (N*C, L)

    itemsize = jnp.dtype(x.dtype).itemsize
    tile_budget = _tile_budget_bytes()
    rows_tile, l_tile = _choose_tiles(rows, L_out, itemsize, tile_budget)

    grid = (_cdiv(rows, rows_tile), _cdiv(L_out, l_tile))

    # in + out blocks, each double-buffered -> 4x tile; keep some headroom but
    # never request less than the 32 MiB scoped default.
    tile_bytes = rows_tile * l_tile * itemsize
    vmem_limit_bytes = max(32 << 20, 4 * tile_bytes + (8 << 20))

    copy_bytes = 2 * rows * L_out * itemsize  # read + write of the kept prefix

    out2 = pl.pallas_call(
        _copy_kernel,
        out_shape=jax.ShapeDtypeStruct((rows, L_out), x.dtype),
        grid=grid,
        in_specs=[
            # The input window tiles only the first ~L_out columns; at most the
            # final partial column block touches the chomped tail, and those
            # lanes are masked on the output side.
            pl.BlockSpec((rows_tile, l_tile), lambda i, j: (i, j)),
        ],
        out_specs=pl.BlockSpec((rows_tile, l_tile), lambda i, j: (i, j)),
        compiler_params=pltpu.CompilerParams(
            dimension_semantics=("parallel", "parallel"),
            vmem_limit_bytes=vmem_limit_bytes,
        ),
        cost_estimate=pl.CostEstimate(
            flops=0, transcendentals=0, bytes_accessed=copy_bytes
        ),
    )(x2)

    return out2.reshape(N, C, L_out)


if __name__ == "__main__":
    # Chomp1d has no learnable parameters; chomp_size is a constructor arg.
    chomp_size = 3

    key = jax.random.PRNGKey(0)
    N, C, L = 2, 4, 16
    x = jax.random.normal(key, (N, C, L), dtype=jnp.float32)

    out = chomp1d(x, chomp_size)
    out = jax.block_until_ready(out)

    # Reference check against plain slicing (same semantics as PyTorch).
    ref = x[:, :, :-chomp_size]
    assert out.shape == (N, C, L - chomp_size), out.shape
    assert jnp.array_equal(out, ref), "Pallas Chomp1d mismatch vs reference"

    print("KERNEL_OK")
</pallas_src>

<mosaic_0001>
module attributes {stable_mosaic.version = 11 : i64} {
  func.func @_copy_kernel(%arg0: i32, %arg1: i32, %arg2: memref<8x128xf32, #tpu.memory_space<vmem>>, %arg3: memref<8x128xf32, #tpu.memory_space<vmem>>) attributes {dimension_semantics = [#tpu.dimension_semantics<parallel>, #tpu.dimension_semantics<parallel>], iteration_bounds = array<i64: 1, 1>, scalar_prefetch = 0 : i64, scratch_operands = 0 : i64, tpu.core_type = #tpu.core_type<tc>, window_params = [{transform_indices = @transform_0, window_bounds = array<i64: 8, 128>}, {transform_indices = @transform_1, window_bounds = array<i64: 8, 128>}]} {
    %c0 = arith.constant 0 : index
    %c0_0 = arith.constant 0 : index
    %0 = vector.load %arg2[%c0, %c0_0] : memref<8x128xf32, #tpu.memory_space<vmem>>, vector<8x128xf32>
    %c0_1 = arith.constant 0 : index
    %c0_2 = arith.constant 0 : index
    %1 = vector.load %arg3[%c0_1, %c0_2] : memref<8x128xf32, #tpu.memory_space<vmem>>, vector<8x128xf32>
    tpu.vector_store %arg3[%c0_1, %c0_2], %0 {strides = array<i32>} : memref<8x128xf32, #tpu.memory_space<vmem>>, vector<8x128xf32>,
    return
  }
  func.func @transform_0(%arg0: i32, %arg1: i32) -> (i32, i32) {
    %c0_i32 = arith.constant 0 : i32
    return %arg0, %arg1 : i32, i32
  }
  func.func @transform_1(%arg0: i32, %arg1: i32) -> (i32, i32) {
    %c0_i32 = arith.constant 0 : i32
    return %arg0, %arg1 : i32, i32
  }
}

</mosaic_0001>

<llo_original>
// kernel: tpu_custom_call.1
$region0: #{tpu_custom_call.1}
  #allocation0 [shape = 'u32[]', space=smem, size = 0x4, offset = 0x4, fixed_abs, tag = 'smem constant byte address 0x4 - core index']
  #allocation1 [shape = 'u32[144,128]{1,0:T(1,128)}', space=vmem, size = 0x12000, scoped, tag = 'internal scratch']
  %s0 = inlined_call_operand.hbm [shape: f32[8,16], index: 0, kind: input, shape index: {}]
  %s1 = inlined_call_operand.hbm [shape: f32[8,13], index: 1, kind: output, shape index: {}]
  %s2 = sld [smem:[#allocation0]]
  $region18: #{tpu_custom_call.1} parent=0
    _
  %s4 = ssub.s32 1, %s2
  %s5 = scalar_select 0, %s4, %s2
  $region1: #{tpu_custom_call.1} parent=0
    #allocation2 [shape = 'u8[4096]{0}', space=vmem, size = 0x1000, scoped, tag = 'input window, operand 0, single buffered']
    #allocation3 [shape = 's32[1]{0}', space=sflag, size = 0x4, scoped, tag = 'scoped memory for tpu_custom_call.1']
    #allocation4 [shape = 's32[1]{0}', space=sflag, size = 0x4, scoped, tag = 'scoped memory for tpu_custom_call.1']
    #allocation5 [shape = 'u8[4096]{0}', space=vmem, size = 0x1000, scoped, tag = 'output window, operand 0, single buffered']
    %6 = vsyncpa [#allocation3], 0
    %7 = vsyncpa [#allocation4], 0
    // Predicated region
    $region2: #{tpu_custom_call.1} parent=1 // pred_check
      _
    $region3: #{tpu_custom_call.1} parent=1 // pred_check_branch
      %9 = sbr.rel (0) target = $region5
    $region4: #{tpu_custom_call.1} parent=1 // pred_region
      %s11 = ssub.s32 128, 128
      %12 = vsyncadd [#allocation3], %s11
      %s14 = sshll.u32 [#allocation2], 4
      %s15 = int_to_ptr.vmem [resolvable:$true] %s14
      %17 = dma.hbm_to_vmem [thread:$0]  %s0, 128, %s15, [#allocation3]
    $region5: #{tpu_custom_call.1} parent=1 // pred_fallthru
      _
    // Predicated region
    $region6: #{tpu_custom_call.1} parent=1 // pred_check
      _
    $region7: #{tpu_custom_call.1} parent=1 // pred_check_branch
      %19 = sbr.rel (0) target = $region9
    $region8: #{tpu_custom_call.1} parent=1 // pred_region
      %20 = dma.done [#allocation3], 128
    $region9: #{tpu_custom_call.1} parent=1 // pred_fallthru
      _
    %v21 = vld [vmem:[#allocation2] sm:$0xff]
    %22 = vst [vmem:[#allocation5] sm:$0xff] %v21
    // Predicated region
    $region10: #{tpu_custom_call.1} parent=1 // pred_check
      _
    $region11: #{tpu_custom_call.1} parent=1 // pred_check_branch
      %24 = sbr.rel (0) target = $region13
    $region12: #{tpu_custom_call.1} parent=1 // pred_region
      %s26 = ssub.s32 128, 128
      %27 = vsyncadd [#allocation4], %s26
      %s29 = sshll.u32 [#allocation5], 4
      %s30 = int_to_ptr.vmem [resolvable:$true] %s29
      %32 = dma.vmem_to_hbm [thread:$0]  %s30, 128, %s1, [#allocation4]
    $region13: #{tpu_custom_call.1} parent=1 // pred_fallthru
      _
    // Predicated region
    $region14: #{tpu_custom_call.1} parent=1 // pred_check
      _
    $region15: #{tpu_custom_call.1} parent=1 // pred_check_branch
      %34 = sbr.rel (0) target = $region17
    $region16: #{tpu_custom_call.1} parent=1 // pred_region
      %35 = dma.done [#allocation4], 128
    $region17: #{tpu_custom_call.1} parent=1 // pred_fallthru
      _
    %36 = vsyncpa [#allocation3], 1
    %37 = vsyncpa [#allocation4], 1

</llo_original>
